<compile_context>
chip_gen: v6e
topology: v6e:2x2x1
jax: 0.10.0
libtpu: 0.0.40
codegen_flags: <defaults>
</compile_context>

<pallas_src>
import functools

import jax
import jax.numpy as jnp
from jax import lax
from jax.experimental import pallas as pl
from jax.experimental.pallas import tpu as pltpu


def _round_up(x, m):
    return ((x + m - 1) // m) * m


def _ce_loss_kernel(x_ref, w_ref, b_ref, lab_ref, ce_ref,
                    m_ref, l_ref, lab_logit_ref, *, nclasses, tc, mask_classes):
    # x_ref:   (TM, D)  input rows for this row tile (stored dtype)
    # w_ref:   (TC, D)  Linear weight tile, native (C, D) layout, stored dtype
    # b_ref:   (1, TC)  bias tile (f32)
    # lab_ref: (TM, 1)  int32 label per row
    # ce_ref:  (TM, 1)  per-row cross-entropy (written at the last class tile)
    # scratch: m_ref / l_ref / lab_logit_ref (TM, 1) f32, persist across class tiles
    j = pl.program_id(1)

    @pl.when(j == 0)
    def _init():
        m_ref[...] = jnp.full(m_ref.shape, -jnp.inf, jnp.float32)
        l_ref[...] = jnp.zeros(l_ref.shape, jnp.float32)
        lab_logit_ref[...] = jnp.zeros(lab_logit_ref.shape, jnp.float32)

    x = x_ref[...]                       # (TM, D)
    w = w_ref[...]                       # (TC, D)
    if x.dtype != w.dtype:
        # Per-tile cast (no wrapper HBM pass). With a f32 Linear weight this is
        # exactly the module's `.float()`; with bf16 weights the MXU runs at
        # bf16 peak and accumulation stays f32 below.
        x = x.astype(w.dtype)

    # MXU matmul contracting over D with the weight in its native layout
    # (equivalent to x @ W.T), f32 accumulation.
    logits = lax.dot_general(
        x, w, (((1,), (1,)), ((), ())),
        preferred_element_type=jnp.float32) + b_ref[...]          # (TM, TC) f32

    # Global class ids of this tile (needed for the label select).
    col = lax.broadcasted_iota(jnp.int32, logits.shape, 1) + j * tc

    if mask_classes:
        # Only emitted when nclasses % tc != 0: the ragged last class tile is
        # served by Pallas' implicit partial block, so mask the garbage
        # columns to -inf before they can touch the max / exp-sum / gather.
        logits = jnp.where(col < nclasses, logits, -jnp.inf)

    # Online log-sum-exp update.
    m_prev = m_ref[...]
    m_new = jnp.maximum(m_prev, jnp.max(logits, axis=-1, keepdims=True))
    alpha = jnp.exp(m_prev - m_new)
    l_ref[...] = alpha * l_ref[...] + jnp.sum(
        jnp.exp(logits - m_new), axis=-1, keepdims=True)
    m_ref[...] = m_new

    # Label logit via masked select (only the class tile containing the label
    # contributes a non-zero term; labels < nclasses so garbage columns never
    # match).
    lab = lab_ref[...]                                            # (TM, 1) int32
    lab_logit_ref[...] += jnp.sum(
        jnp.where(col == lab, logits, 0.0), axis=-1, keepdims=True)

    @pl.when(j == pl.num_programs(1) - 1)
    def _finalize():
        ce_ref[...] = (m_ref[...] + jnp.log(l_ref[...])
                       - lab_logit_ref[...]).astype(ce_ref.dtype)


def ce_loss(student_input, labels, weight, bias, batch_size, *,
            row_tile=256, class_tile=512,
            vmem_budget_bytes=40 * 1024 * 1024):
    """Pallas CELoss forward.

    student_input: (2*batch_size, in_dim)        (any float dtype, no wrapper cast)
    labels:        (batch_size,) int class indices (same labels for both crops)
    weight:        (nclasses, in_dim)  -- native PyTorch Linear layout, streamed
                                          in its stored dtype (f32 or bf16)
    bias:          (nclasses,)
    """
    two_b, in_dim = student_input.shape
    assert two_b == 2 * batch_size
    nclasses, w_in = weight.shape
    assert w_in == in_dim

    x = student_input                    # stored dtype; cast per-tile in-kernel
    w = weight                           # stored dtype; no upcast, no pad
    b = bias.astype(jnp.float32).reshape(1, nclasses)      # tiny
    lab = jnp.concatenate([labels, labels]).astype(jnp.int32).reshape(two_b, 1)

    x_bytes = x.dtype.itemsize
    w_bytes = w.dtype.itemsize

    # ---- tile selection -----------------------------------------------------
    # Row tile: as large as possible (minimizes full-weight re-reads); for small
    # 2B this collapses to a single row tile so W is streamed exactly once.
    # TODO(synk): on v7x with 2 TensorCores and large 2B, two+ row tiles keep
    # both cores busy; with small 2B the single-W-read tradeoff wins.
    tm = min(_round_up(row_tile, 8), _round_up(two_b, 8))

    # Class tile: multiple of 128 (lane dim of the bias block / MXU width),
    # capped by the class count and by a VMEM budget (double-buffered blocks).
    tc_cap = max(128, (class_tile // 128) * 128)
    tc = min(tc_cap, _round_up(nclasses, 128))

    def vmem_need(tm_, tc_):
        return (2 * tm_ * in_dim * x_bytes        # x blocks (double-buffered)
                + 2 * tc_ * in_dim * w_bytes      # weight blocks (double-buffered)
                + 2 * tc_ * 4                     # bias blocks
                + 4 * tm_ * 4                     # label + output blocks
                + 3 * tm_ * 4                     # (TM,1) accumulator scratch
                + 3 * tm_ * tc_ * 4)              # logits / exp / select temporaries

    while tc > 128 and vmem_need(tm, tc) > vmem_budget_bytes:
        tc -= 128
    while tm > 8 and vmem_need(tm, tc) > vmem_budget_bytes:
        tm = max(8, _round_up(tm // 2, 8))
    # TODO(synk): for extremely large in_dim a third "arbitrary" grid axis over
    # D with an f32 logits accumulator would be needed; not required here.

    grid = (pl.cdiv(two_b, tm), pl.cdiv(nclasses, tc))
    mask_classes = (nclasses % tc) != 0

    kernel = functools.partial(_ce_loss_kernel, nclasses=nclasses, tc=tc,
                               mask_classes=mask_classes)

    n_row_tiles = pl.cdiv(two_b, tm)
    cost = pl.CostEstimate(
        flops=2 * two_b * nclasses * in_dim,
        transcendentals=two_b * nclasses,
        bytes_accessed=(two_b * in_dim * x_bytes
                        + n_row_tiles * nclasses * in_dim * w_bytes
                        + nclasses * 4 + two_b * 4 + two_b * 4),
    )

    ce_rows = pl.pallas_call(
        kernel,
        out_shape=jax.ShapeDtypeStruct((two_b, 1), jnp.float32),
        grid=grid,
        in_specs=[
            pl.BlockSpec((tm, in_dim), lambda i, j: (i, 0)),   # x rows
            pl.BlockSpec((tc, in_dim), lambda i, j: (j, 0)),   # weight (C, D)
            pl.BlockSpec((1, tc), lambda i, j: (0, j)),        # bias
            pl.BlockSpec((tm, 1), lambda i, j: (i, 0)),        # labels
        ],
        out_specs=pl.BlockSpec((tm, 1), lambda i, j: (i, 0)),  # per-row CE
        scratch_shapes=[
            pltpu.VMEM((tm, 1), jnp.float32),   # running max m
            pltpu.VMEM((tm, 1), jnp.float32),   # running sum l
            pltpu.VMEM((tm, 1), jnp.float32),   # running label logit
        ],
        compiler_params=pltpu.CompilerParams(
            dimension_semantics=("parallel", "arbitrary"),
            vmem_limit_bytes=48 * 1024 * 1024,   # fits v7x's 64 MiB with headroom
        ),
        cost_estimate=cost,
    )(x, w, b, lab)

    # sum of per-row CE / (2 * B * B)  ==  module's total_loss
    total = jnp.sum(ce_rows[:, 0]) / jnp.float32(2.0 * batch_size * batch_size)
    return total


def _reference(student_input, labels, weight, bias, batch_size):
    """Pure-JAX reference mirroring the PyTorch forward."""
    logits = jnp.dot(student_input.astype(jnp.float32),
                     weight.astype(jnp.float32).T,
                     precision=jax.lax.Precision.HIGHEST) + bias.astype(jnp.float32)
    total = 0.0
    for crop in range(2):
        sl = logits[crop * batch_size:(crop + 1) * batch_size]
        logp = jax.nn.log_softmax(sl, axis=-1)
        ce = -jnp.take_along_axis(logp, labels[:, None], axis=-1).mean()
        total += ce / batch_size
    return total / 2.0


if __name__ == "__main__":
    # --- test 1: module-sized tiny demo (single ragged class tile) -----------
    nclasses, in_dim, batch_size = 8, 32, 4
    k_w, k_b, k_x, k_l = jax.random.split(jax.random.PRNGKey(0), 4)
    bound = 1.0 / (in_dim ** 0.5)
    weight = jax.random.uniform(k_w, (nclasses, in_dim), jnp.float32, -bound, bound)
    bias = jax.random.uniform(k_b, (nclasses,), jnp.float32, -bound, bound)
    student_input = jax.random.normal(k_x, (2 * batch_size, in_dim), jnp.float32)
    labels = jax.random.randint(k_l, (batch_size,), 0, nclasses, jnp.int32)

    loss = jax.block_until_ready(
        ce_loss(student_input, labels, weight, bias, batch_size))
    ref = _reference(student_input, labels, weight, bias, batch_size)
    assert jnp.allclose(loss, ref, rtol=1e-4, atol=1e-4), (loss, ref)

    # --- test 2: multiple row + class tiles, unaligned class count -----------
    # Exercises the online LSE across class tiles and the no-pad ragged path.
    nclasses, in_dim, batch_size = 300, 128, 8
    k_w, k_b, k_x, k_l = jax.random.split(jax.random.PRNGKey(1), 4)
    bound = 1.0 / (in_dim ** 0.5)
    weight = jax.random.uniform(k_w, (nclasses, in_dim), jnp.float32, -bound, bound)
    bias = jax.random.uniform(k_b, (nclasses,), jnp.float32, -bound, bound)
    student_input = jax.random.normal(k_x, (2 * batch_size, in_dim), jnp.float32)
    labels = jax.random.randint(k_l, (batch_size,), 0, nclasses, jnp.int32)

    loss2 = jax.block_until_ready(
        ce_loss(student_input, labels, weight, bias, batch_size,
                row_tile=8, class_tile=128))
    ref2 = _reference(student_input, labels, weight, bias, batch_size)
    assert jnp.allclose(loss2, ref2, rtol=2e-4, atol=2e-4), (loss2, ref2)

    print("KERNEL_OK")
</pallas_src>

<mosaic_0001>
module attributes {stable_mosaic.version = 11 : i64} {
  func.func @_ce_loss_kernel(%arg0: i32, %arg1: i32, %arg2: memref<8x32xf32, #tpu.memory_space<vmem>>, %arg3: memref<128x32xf32, #tpu.memory_space<vmem>>, %arg4: memref<1x128xf32, #tpu.memory_space<vmem>>, %arg5: memref<8x1xi32, #tpu.memory_space<vmem>>, %arg6: memref<8x1xf32, #tpu.memory_space<vmem>>, %arg7: memref<8x1xf32, #tpu.memory_space<vmem>>, %arg8: memref<8x1xf32, #tpu.memory_space<vmem>>, %arg9: memref<8x1xf32, #tpu.memory_space<vmem>>) attributes {dimension_semantics = [#tpu.dimension_semantics<parallel>, #tpu.dimension_semantics<arbitrary>], iteration_bounds = array<i64: 1, 1>, scalar_prefetch = 0 : i64, scratch_operands = 3 : i64, tpu.core_type = #tpu.core_type<tc>, window_params = [{transform_indices = @transform_0, window_bounds = array<i64: 8, 32>}, {transform_indices = @transform_1, window_bounds = array<i64: 128, 32>}, {transform_indices = @transform_2, window_bounds = array<i64: 1, 128>}, {transform_indices = @transform_3, window_bounds = array<i64: 8, 1>}, {transform_indices = @transform_4, window_bounds = array<i64: 8, 1>}]} {
    %c0_i32 = arith.constant 0 : i32
    %0 = arith.cmpi eq, %arg1, %c0_i32 : i32
    %1 = arith.extui %0 : i1 to i32
    %c0_i32_0 = arith.constant 0 : i32
    %2 = arith.cmpi ne, %1, %c0_i32_0 : i32
    scf.if %2 {
      %cst_27 = arith.constant 0xFF800000 : f32
      %46 = vector.broadcast %cst_27 : f32 to vector<8x1xf32>
      %c0_28 = arith.constant 0 : index
      %c0_29 = arith.constant 0 : index
      %47 = vector.load %arg7[%c0_28, %c0_29] : memref<8x1xf32, #tpu.memory_space<vmem>>, vector<8x1xf32>
      tpu.vector_store %arg7[%c0_28, %c0_29], %46 {strides = array<i32>} : memref<8x1xf32, #tpu.memory_space<vmem>>, vector<8x1xf32>,
      %cst_30 = arith.constant 0.000000e+00 : f32
      %48 = vector.broadcast %cst_30 : f32 to vector<8x1xf32>
      %c0_31 = arith.constant 0 : index
      %c0_32 = arith.constant 0 : index
      %49 = vector.load %arg8[%c0_31, %c0_32] : memref<8x1xf32, #tpu.memory_space<vmem>>, vector<8x1xf32>
      tpu.vector_store %arg8[%c0_31, %c0_32], %48 {strides = array<i32>} : memref<8x1xf32, #tpu.memory_space<vmem>>, vector<8x1xf32>,
      %cst_33 = arith.constant 0.000000e+00 : f32
      %50 = vector.broadcast %cst_33 : f32 to vector<8x1xf32>
      %c0_34 = arith.constant 0 : index
      %c0_35 = arith.constant 0 : index
      %51 = vector.load %arg9[%c0_34, %c0_35] : memref<8x1xf32, #tpu.memory_space<vmem>>, vector<8x1xf32>
      tpu.vector_store %arg9[%c0_34, %c0_35], %50 {strides = array<i32>} : memref<8x1xf32, #tpu.memory_space<vmem>>, vector<8x1xf32>,
    } else {
    }
    %c0 = arith.constant 0 : index
    %c0_1 = arith.constant 0 : index
    %3 = vector.load %arg2[%c0, %c0_1] : memref<8x32xf32, #tpu.memory_space<vmem>>, vector<8x32xf32>
    %c0_2 = arith.constant 0 : index
    %c0_3 = arith.constant 0 : index
    %4 = vector.load %arg3[%c0_2, %c0_3] : memref<128x32xf32, #tpu.memory_space<vmem>>, vector<128x32xf32>
    %cst = arith.constant dense<0.000000e+00> : vector<8x128xf32>
    %5 = tpu.matmul %3, %4, %cst {dimension_numbers = #tpu.dot_dimension_numbers<[1], [1], [0], [0], [0, 0, 1, 0], [], []>} : vector<8x32xf32>, vector<128x32xf32>, vector<8x128xf32> -> vector<8x128xf32>
    %c0_4 = arith.constant 0 : index
    %c0_5 = arith.constant 0 : index
    %6 = vector.load %arg4[%c0_4, %c0_5] : memref<1x128xf32, #tpu.memory_space<vmem>>, vector<1x128xf32>
    %7 = vector.broadcast %6 : vector<1x128xf32> to vector<8x128xf32>
    %8 = arith.addf %5, %7 : vector<8x128xf32>
    %9 = tpu.iota {dimensions = array<i32: 1>} : vector<8x128xi32>
    %c128_i32 = arith.constant 128 : i32
    %10 = arith.muli %arg1, %c128_i32 : i32
    %11 = vector.broadcast %10 : i32 to vector<8x128xi32>
    %12 = arith.addi %9, %11 : vector<8x128xi32>
    %c8_i32 = arith.constant 8 : i32
    %13 = vector.broadcast %c8_i32 : i32 to vector<8x128xi32>
    %14 = arith.cmpi slt, %12, %13 : vector<8x128xi32>
    %cst_6 = arith.constant 0xFF800000 : f32
    %15 = vector.broadcast %cst_6 : f32 to vector<8x128xf32>
    %16 = arith.select %14, %8, %15 : vector<8x128xi1>, vector<8x128xf32>
    %c0_7 = arith.constant 0 : index
    %c0_8 = arith.constant 0 : index
    %17 = vector.load %arg7[%c0_7, %c0_8] : memref<8x1xf32, #tpu.memory_space<vmem>>, vector<8x1xf32>
    %cst_9 = arith.constant dense<0xFF800000> : vector<8xf32>
    %18 = vector.multi_reduction <maximumf>, %16, %cst_9 [1] : vector<8x128xf32> to vector<8xf32>
    %19 = vector.shape_cast %18 : vector<8xf32> to vector<8x1xf32>
    %20 = arith.maximumf %17, %19 : vector<8x1xf32>
    %21 = arith.subf %17, %20 : vector<8x1xf32>
    %22 = math.exp %21 : vector<8x1xf32>
    %c0_10 = arith.constant 0 : index
    %c0_11 = arith.constant 0 : index
    %23 = vector.load %arg8[%c0_10, %c0_11] : memref<8x1xf32, #tpu.memory_space<vmem>>, vector<8x1xf32>
    %24 = arith.mulf %22, %23 : vector<8x1xf32>
    %25 = vector.broadcast %20 : vector<8x1xf32> to vector<8x128xf32>
    %26 = arith.subf %16, %25 : vector<8x128xf32>
    %27 = math.exp %26 : vector<8x128xf32>
    %cst_12 = arith.constant dense<0.000000e+00> : vector<8xf32>
    %28 = vector.multi_reduction <add>, %27, %cst_12 [1] : vector<8x128xf32> to vector<8xf32>
    %29 = vector.shape_cast %28 : vector<8xf32> to vector<8x1xf32>
    %30 = arith.addf %24, %29 : vector<8x1xf32>
    %c0_13 = arith.constant 0 : index
    %c0_14 = arith.constant 0 : index
    %31 = vector.load %arg8[%c0_13, %c0_14] : memref<8x1xf32, #tpu.memory_space<vmem>>, vector<8x1xf32>
    tpu.vector_store %arg8[%c0_13, %c0_14], %30 {strides = array<i32>} : memref<8x1xf32, #tpu.memory_space<vmem>>, vector<8x1xf32>,
    %c0_15 = arith.constant 0 : index
    %c0_16 = arith.constant 0 : index
    %32 = vector.load %arg7[%c0_15, %c0_16] : memref<8x1xf32, #tpu.memory_space<vmem>>, vector<8x1xf32>
    tpu.vector_store %arg7[%c0_15, %c0_16], %20 {strides = array<i32>} : memref<8x1xf32, #tpu.memory_space<vmem>>, vector<8x1xf32>,
    %c0_17 = arith.constant 0 : index
    %c0_18 = arith.constant 0 : index
    %33 = vector.load %arg5[%c0_17, %c0_18] : memref<8x1xi32, #tpu.memory_space<vmem>>, vector<8x1xi32>
    %c0_19 = arith.constant 0 : index
    %c0_20 = arith.constant 0 : index
    %34 = vector.load %arg9[%c0_19, %c0_20] : memref<8x1xf32, #tpu.memory_space<vmem>>, vector<8x1xf32>
    %35 = vector.broadcast %33 : vector<8x1xi32> to vector<8x128xi32>
    %36 = arith.cmpi eq, %12, %35 : vector<8x128xi32>
    %cst_21 = arith.constant 0.000000e+00 : f32
    %37 = vector.broadcast %cst_21 : f32 to vector<8x128xf32>
    %38 = arith.select %36, %16, %37 : vector<8x128xi1>, vector<8x128xf32>
    %cst_22 = arith.constant dense<0.000000e+00> : vector<8xf32>
    %39 = vector.multi_reduction <add>, %38, %cst_22 [1] : vector<8x128xf32> to vector<8xf32>
    %40 = vector.shape_cast %39 : vector<8xf32> to vector<8x1xf32>
    %41 = arith.addf %34, %40 : vector<8x1xf32>
    %c0_23 = arith.constant 0 : index
    %c0_24 = arith.constant 0 : index
    %42 = vector.load %arg9[%c0_23, %c0_24] : memref<8x1xf32, #tpu.memory_space<vmem>>, vector<8x1xf32>
    tpu.vector_store %arg9[%c0_23, %c0_24], %41 {strides = array<i32>} : memref<8x1xf32, #tpu.memory_space<vmem>>, vector<8x1xf32>,
    %c0_i32_25 = arith.constant 0 : i32
    %43 = arith.cmpi eq, %arg1, %c0_i32_25 : i32
    %44 = arith.extui %43 : i1 to i32
    %c0_i32_26 = arith.constant 0 : i32
    %45 = arith.cmpi ne, %44, %c0_i32_26 : i32
    scf.if %45 {
      %c0_27 = arith.constant 0 : index
      %c0_28 = arith.constant 0 : index
      %46 = vector.load %arg7[%c0_27, %c0_28] : memref<8x1xf32, #tpu.memory_space<vmem>>, vector<8x1xf32>
      %c0_29 = arith.constant 0 : index
      %c0_30 = arith.constant 0 : index
      %47 = vector.load %arg8[%c0_29, %c0_30] : memref<8x1xf32, #tpu.memory_space<vmem>>, vector<8x1xf32>
      %48 = math.log %47 : vector<8x1xf32>
      %49 = arith.addf %46, %48 : vector<8x1xf32>
      %c0_31 = arith.constant 0 : index
      %c0_32 = arith.constant 0 : index
      %50 = vector.load %arg9[%c0_31, %c0_32] : memref<8x1xf32, #tpu.memory_space<vmem>>, vector<8x1xf32>
      %51 = arith.subf %49, %50 : vector<8x1xf32>
      %c0_33 = arith.constant 0 : index
      %c0_34 = arith.constant 0 : index
      %52 = vector.load %arg6[%c0_33, %c0_34] : memref<8x1xf32, #tpu.memory_space<vmem>>, vector<8x1xf32>
      tpu.vector_store %arg6[%c0_33, %c0_34], %51 {strides = array<i32>} : memref<8x1xf32, #tpu.memory_space<vmem>>, vector<8x1xf32>,
    } else {
    }
    return
  }
  func.func @transform_0(%arg0: i32, %arg1: i32) -> (i32, i32) {
    %c0_i32 = arith.constant 0 : i32
    %c0_i32_0 = arith.constant 0 : i32
    return %arg0, %c0_i32 : i32, i32
  }
  func.func @transform_1(%arg0: i32, %arg1: i32) -> (i32, i32) {
    %c0_i32 = arith.constant 0 : i32
    %c0_i32_0 = arith.constant 0 : i32
    return %arg1, %c0_i32 : i32, i32
  }
  func.func @transform_2(%arg0: i32, %arg1: i32) -> (i32, i32) {
    %c0_i32 = arith.constant 0 : i32
    %c0_i32_0 = arith.constant 0 : i32
    return %c0_i32, %arg1 : i32, i32
  }
  func.func @transform_3(%arg0: i32, %arg1: i32) -> (i32, i32) {
    %c0_i32 = arith.constant 0 : i32
    %c0_i32_0 = arith.constant 0 : i32
    return %arg0, %c0_i32 : i32, i32
  }
  func.func @transform_4(%arg0: i32, %arg1: i32) -> (i32, i32) {
    %c0_i32 = arith.constant 0 : i32
    %c0_i32_0 = arith.constant 0 : i32
    return %arg0, %c0_i32 : i32, i32
  }
}

</mosaic_0001>

<llo_original>
// kernel: tpu_custom_call.1
$region0: #{tpu_custom_call.1}
  #allocation0 [shape = 'u32[]', space=smem, size = 0x4, offset = 0x4, fixed_abs, tag = 'smem constant byte address 0x4 - core index']
  #allocation1 [shape = 'u32[144,128]{1,0:T(1,128)}', space=vmem, size = 0x12000, scoped, tag = 'internal scratch']
  #allocation2 [shape = 'f32[8,1]{1,0:T(8,128)}', space=vmem, size = 0x1000, scoped, tag = 'scratch operand']
  #allocation3 [shape = 'f32[8,1]{1,0:T(8,128)}', space=vmem, size = 0x1000, scoped, tag = 'scratch operand']
  #allocation4 [shape = 'f32[8,1]{1,0:T(8,128)}', space=vmem, size = 0x1000, scoped, tag = 'scratch operand']
  %s0 = inlined_call_operand.vmem [shape: f32[8,32], index: 0, kind: input, shape index: {}]
  %s1 = inlined_call_operand.hbm [shape: f32[8,32], index: 1, kind: input, shape index: {}]
  %s2 = inlined_call_operand.vmem [shape: f32[1,8], index: 2, kind: input, shape index: {}]
  %s3 = inlined_call_operand.vmem [shape: s32[8,1], index: 3, kind: input, shape index: {}]
  %s4 = inlined_call_operand.vmem [shape: f32[8,1], index: 4, kind: output, shape index: {}]
  %s5 = sld [smem:[#allocation0]]
  $region38: #{tpu_custom_call.1} parent=0
    _
  %s7 = ssub.s32 1, %s5
  %s8 = scalar_select 0, %s7, %s5
  $region1: #{tpu_custom_call.1} parent=0
    #allocation5 [shape = 'u8[65536]{0}', space=vmem, size = 0x10000, scoped, tag = 'input window, operand 1, single buffered']
    #allocation6 [shape = 's32[1]{0}', space=sflag, size = 0x4, scoped, tag = 'scoped memory for tpu_custom_call.1']
    %9 = vsyncpa [#allocation6], 0
    // Predicated region
    $region2: #{tpu_custom_call.1} parent=1 // pred_check
      _
    $region3: #{tpu_custom_call.1} parent=1 // pred_check_branch
      %11 = sbr.rel (0) target = $region5
    $region4: #{tpu_custom_call.1} parent=1 // pred_region
      _
    $region5: #{tpu_custom_call.1} parent=1 // pred_fallthru
      _
    // Predicated region
    $region6: #{tpu_custom_call.1} parent=1 // pred_check
      _
    $region7: #{tpu_custom_call.1} parent=1 // pred_check_branch
      %13 = sbr.rel (0) target = $region9
    $region8: #{tpu_custom_call.1} parent=1 // pred_region
      %s15 = ssub.s32 2048, 128
      %16 = vsyncadd [#allocation6], %s15
      %s17 = sshll.u32 [#allocation5], 4
      %s18 = int_to_ptr.vmem [resolvable:$true] %s17
      %23 = dma.hbm_to_vmem [thread:$0]  %s1, 128, %s18, [#allocation6], 128, 128, 8
    $region9: #{tpu_custom_call.1} parent=1 // pred_fallthru
      _
    // Predicated region
    $region10: #{tpu_custom_call.1} parent=1 // pred_check
      _
    $region11: #{tpu_custom_call.1} parent=1 // pred_check_branch
      %25 = sbr.rel (0) target = $region13
    $region12: #{tpu_custom_call.1} parent=1 // pred_region
      _
    $region13: #{tpu_custom_call.1} parent=1 // pred_fallthru
      _
    // Predicated region
    $region14: #{tpu_custom_call.1} parent=1 // pred_check
      _
    $region15: #{tpu_custom_call.1} parent=1 // pred_check_branch
      %27 = sbr.rel (0) target = $region17
    $region16: #{tpu_custom_call.1} parent=1 // pred_region
      _
    $region17: #{tpu_custom_call.1} parent=1 // pred_fallthru
      _
    // Predicated region
    $region18: #{tpu_custom_call.1} parent=1 // pred_check
      _
    $region19: #{tpu_custom_call.1} parent=1 // pred_check_branch
      %29 = sbr.rel (0) target = $region21
    $region20: #{tpu_custom_call.1} parent=1 // pred_region
      %30 = dma.done [#allocation6], 2048
    $region21: #{tpu_custom_call.1} parent=1 // pred_fallthru
      _
    %p31 = scmp.eq.s32.totalorder 0, 0
    // Predicated region
    $region22: #{tpu_custom_call.1} parent=1 // pred_check
      %p32 = pneg %p31
    $region23: #{tpu_custom_call.1} parent=1 // pred_check_branch
      %34 = sbr.rel (%p32) target = $region25
    $region24: #{tpu_custom_call.1} parent=1 // pred_region
      %vm35 = vcmask 7168
      %36 = vst.msk [vmem:[#allocation2] sm:$0xff] %vm35, -inf
      %37 = vst.msk [vmem:[#allocation3] sm:$0xff] %vm35, 0.0
      %38 = vst.msk [vmem:[#allocation4] sm:$0xff] %vm35, 0.0
    $region25: #{tpu_custom_call.1} parent=1 // pred_fallthru
      _
    %v39 = vld [vmem:[%s0] sm:$0xff]
    %v40 = vld [vmem:[#allocation5] sm:$0xff]
    %v41 = vld [vmem:[#allocation5 + $0x8] sm:$0xff]
    %v42 = vld [vmem:[#allocation5 + $0x10] sm:$0xff]
    %v43 = vld [vmem:[#allocation5 + $0x18] sm:$0xff]
    %v44 = vld [vmem:[#allocation5 + $0x20] sm:$0xff]
    %v45 = vld [vmem:[#allocation5 + $0x28] sm:$0xff]
    %v46 = vld [vmem:[#allocation5 + $0x30] sm:$0xff]
    %v47 = vld [vmem:[#allocation5 + $0x38] sm:$0xff]
    %v48 = vld [vmem:[#allocation5 + $0x40] sm:$0xff]
    %v49 = vld [vmem:[#allocation5 + $0x48] sm:$0xff]
    %v50 = vld [vmem:[#allocation5 + $0x50] sm:$0xff]
    %v51 = vld [vmem:[#allocation5 + $0x58] sm:$0xff]
    %v52 = vld [vmem:[#allocation5 + $0x60] sm:$0xff]
    %v53 = vld [vmem:[#allocation5 + $0x68] sm:$0xff]
    %v54 = vld [vmem:[#allocation5 + $0x70] sm:$0xff]
    %v55 = vld [vmem:[#allocation5 + $0x78] sm:$0xff]
    %v56 = vld [vmem:[%s2] sm:$0x1]
    %v58 = vlaneseq
    %v59 = vshrl.u32 %v58, 7
    %v60 = vsub.s32 0, %v59
    %v61 = vrot.slane %v56, %v60
    %vm63 = vcmask 261120
    %v65 = vsel %vm63, %v39, 0
    %v68 = vsel %vm63, %v40, 0
    %v71 = vsel %vm63, %v41, 0
    %v74 = vsel %vm63, %v42, 0
    %v77 = vsel %vm63, %v43, 0
    %v80 = vsel %vm63, %v44, 0
    %v83 = vsel %vm63, %v45, 0
    %v86 = vsel %vm63, %v46, 0
    %v89 = vsel %vm63, %v47, 0
    %v92 = vsel %vm63, %v48, 0
    %v95 = vsel %vm63, %v49, 0
    %v98 = vsel %vm63, %v50, 0
    %v101 = vsel %vm63, %v51, 0
    %v104 = vsel %vm63, %v52, 0
    %v107 = vsel %vm63, %v53, 0
    %v110 = vsel %vm63, %v54, 0
    %v113 = vsel %vm63, %v55, 0
    %115 = vmatprep.subr.mxu0 0.0
    %116 = vmatpush1.xpose.msra.mxu0 %v113
    %117 = vmatprep.subr.mxu0 0.0
    %118 = vmatpush1.xpose.msra.mxu0 %v110
    %119 = vmatprep.subr.mxu0 0.0
    %120 = vmatpush1.xpose.msra.mxu0 %v107
    %121 = vmatprep.subr.mxu0 0.0
    %122 = vmatpush1.xpose.msra.mxu0 %v104
    %123 = vmatprep.subr.mxu0 0.0
    %124 = vmatpush1.xpose.msra.mxu0 %v101
    %125 = vmatprep.subr.mxu0 0.0
    %126 = vmatpush1.xpose.msra.mxu0 %v98
    %127 = vmatprep.subr.mxu0 0.0
    %128 = vmatpush1.xpose.msra.mxu0 %v95
    %129 = vmatprep.subr.mxu0 0.0
    %130 = vmatpush1.xpose.msra.mxu0 %v92
    %131 = vmatprep.subr.mxu0 0.0
    %132 = vmatpush1.xpose.msra.mxu0 %v89
    %133 = vmatprep.subr.mxu0 0.0
    %134 = vmatpush1.xpose.msra.mxu0 %v86
    %135 = vmatprep.subr.mxu0 0.0
    %136 = vmatpush1.xpose.msra.mxu0 %v83
    %137 = vmatprep.subr.mxu0 0.0
    %138 = vmatpush1.xpose.msra.mxu0 %v80
    %139 = vmatprep.subr.mxu0 0.0
    %140 = vmatpush1.xpose.msra.mxu0 %v77
    %141 = vmatprep.subr.mxu0 0.0
    %142 = vmatpush1.xpose.msra.mxu0 %v74
    %143 = vmatprep.subr.mxu0 0.0
    %144 = vmatpush1.xpose.msra.mxu0 %v71
    %145 = vmatprep.subr.mxu0 0.0
    %146 = vmatpush1.xpose.msra.mxu0 %v68
    %147 = vmatprep.subr.mxu0 0.0
    %148 = vmatpush2.xpose.msra.mxu0 0.0
    %149 = vmatprep.subr.mxu0 0.0
    %150 = vmatpush2.xpose.msra.mxu0 0.0
    %151 = vmatprep.subr.mxu0 0.0
    %152 = vmatpush2.xpose.msra.mxu0 0.0
    %153 = vmatprep.subr.mxu0 0.0
    %154 = vmatpush2.xpose.msra.mxu0 0.0
    %155 = vmatprep.subr.mxu0 0.0
    %156 = vmatpush2.xpose.msra.mxu0 0.0
    %157 = vmatprep.subr.mxu0 0.0
    %158 = vmatpush2.xpose.msra.mxu0 0.0
    %159 = vmatprep.subr.mxu0 0.0
    %160 = vmatpush2.xpose.msra.mxu0 0.0
    %161 = vmatprep.subr.mxu0 0.0
    %162 = vmatpush2.xpose.msra.mxu0 0.0
    %163 = vmatprep.subr.mxu0 0.0
    %164 = vmatpush2.xpose.msra.mxu0 0.0
    %165 = vmatprep.subr.mxu0 0.0
    %166 = vmatpush2.xpose.msra.mxu0 0.0
    %167 = vmatprep.subr.mxu0 0.0
    %168 = vmatpush2.xpose.msra.mxu0 0.0
    %169 = vmatprep.subr.mxu0 0.0
    %170 = vmatpush2.xpose.msra.mxu0 0.0
    %171 = vmatprep.subr.mxu0 0.0
    %172 = vmatpush2.xpose.msra.mxu0 0.0
    %173 = vmatprep.subr.mxu0 0.0
    %174 = vmatpush2.xpose.msra.mxu0 0.0
    %175 = vmatprep.subr.mxu0 0.0
    %176 = vmatpush2.xpose.msra.mxu0 0.0
    %177 = vmatprep.subr.mxu0 0.0
    %178 = vmatpush2.xpose.msra.mxu0 0.0
    %179 = vmatprep.mubr.f32.mxu0 0.0
    %180 = vmatmul.mubr.f32.gmra.mxu0 %v65
    %v181 = vpop.f32.mrf.mxu0
    %v182 = vadd.f32 %v61, %v181
    %v183 = vpop.f32.mrf.mxu0
    %184 = vdwg.mxu0
    %v185 = vlaneseq
    %v186 = vand.u32 %v185, 127
    %s187 = smul.u32 0, 128
    %v188 = vstv %s187
    %v189 = vadd.s32 %v186, %v188
    %vm190 = vcmp.lt.s32.totalorder %v189, 8
    %v191 = vsel %vm190, %v182, -inf
    %v192 = vld [vmem:[#allocation2] sm:$0xff]
    %193 = vmax.xlane.f32.xlu0 %v191
    %v194 = vpop.xlane.xlu0 %193
    %v195 = vmax.f32 %v192, %v194
    %v196 = vsub.f32 %v192, %v195
    %v197 = vmul.f32 %v196, 1.442695
    %v198 = vpow.pop %v197
    %v199 = vld [vmem:[#allocation3] sm:$0xff]
    %v200 = vmul.f32 %v198, %v199
    %202 = vset.pattern.permute.xlu0 0
    %203 = vperm.xlu0 %202, %v195
    %v204 = vpop.permute.xlu0 %203
    %v206 = vsub.f32 %v191, %v204
    %v207 = vmul.f32 %v206, 1.442695
    %v208 = vpow.pop %v207
    %209 = vadd.xlane.f32.xlu0 %v208
    %v210 = vpop.xlane.xlu0 %209
    %v211 = vadd.f32 %v200, %v210
    %vm212 = vcmask 7168
    %213 = vst.msk [vmem:[#allocation3] sm:$0xff] %vm212, %v211
    %214 = vst.msk [vmem:[#allocation2] sm:$0xff] %vm212, %v195
    %v215 = vld [vmem:[%s3] sm:$0xff]
    %v216 = vld [vmem:[#allocation4] sm:$0xff]
    %217 = vset.pattern.permute.xlu0 0
    %218 = vperm.xlu0 %217, %v215
    %v219 = vpop.permute.xlu0 %218
    %vm220 = vcmp.eq.s32.totalorder %v189, %v219
    %v221 = vsel %vm220, %v191, 0.0
    %222 = vadd.xlane.f32.xlu0 %v221
    %v223 = vpop.xlane.xlu0 %222
    %v224 = vadd.f32 %v216, %v223
    %225 = vst.msk [vmem:[#allocation4] sm:$0xff] %vm212, %v224
    // Predicated region
    $region26: #{tpu_custom_call.1} parent=1 // pred_check
      %p226 = pneg %p31
    $region27: #{tpu_custom_call.1} parent=1 // pred_check_branch
      %228 = sbr.rel (%p226) target = $region29
    $region28: #{tpu_custom_call.1} parent=1 // pred_region
      %v229 = vld [vmem:[#allocation2] sm:$0xff]
      %v230 = vld [vmem:[#allocation3] sm:$0xff]
      %v231 = vlog2.pop %v230
      %v232 = vmul.f32 %v231, 0.6931472
      %v233 = vadd.f32 %v229, %v232
      %v234 = vld [vmem:[#allocation4] sm:$0xff]
      %v235 = vsub.f32 %v233, %v234
      %236 = vst.msk [vmem:[%s4] sm:$0xff] %vm212, %v235
    $region29: #{tpu_custom_call.1} parent=1 // pred_fallthru
      _
    // Predicated region
    $region30: #{tpu_custom_call.1} parent=1 // pred_check
      _
    $region31: #{tpu_custom_call.1} parent=1 // pred_check_branch
      %238 = sbr.rel (0) target = $region33
    $region32: #{tpu_custom_call.1} parent=1 // pred_region
      _
    $region33: #{tpu_custom_call.1} parent=1 // pred_fallthru
      _
    // Predicated region
    $region34: #{tpu_custom_call.1} parent=1 // pred_check
      _
    $region35: #{tpu_custom_call.1} parent=1 // pred_check_branch
      %240 = sbr.rel (0) target = $region37
    $region36: #{tpu_custom_call.1} parent=1 // pred_region
      _
    $region37: #{tpu_custom_call.1} parent=1 // pred_fallthru
      _
    %241 = vsyncpa [#allocation6], 1

</llo_original>
